<compile_context>
chip_gen: v6e
topology: v6e:2x2x1
jax: 0.10.0
libtpu: 0.0.40
codegen_flags: <defaults>
</compile_context>

<pallas_src>
import functools

import jax
import jax.numpy as jnp
from jax.experimental import pallas as pl
from jax.experimental.pallas import tpu as pltpu


def _attention_kernel(enc_ref, hid_ref, we_ref, v_ref, o_ref):
    """One grid step = TB batch rows.

    enc_ref: [TB, S, E2]  encoder outputs tile                (compute dtype)
    hid_ref: [TB, H]      hidden @ W_h^T + bias               (f32)
    we_ref:  [E2, H]      W_e^T, pre-transposed               (compute dtype)
    v_ref:   [1, H]       v_fc weight                         (f32)
    o_ref:   [TB, S]      softmax over the sequence axis      (f32)
    """
    TB, S, E2 = enc_ref.shape
    H = we_ref.shape[1]

    # Single MXU matmul with M = TB*S rows, K = E2, N = H, f32 accumulation.
    x2 = enc_ref[...].reshape(TB * S, E2)
    e = jnp.dot(x2, we_ref[...], preferred_element_type=jnp.float32)    # [TB*S, H]

    # Add the (bias-folded) hidden projection, broadcast over S, then tanh (f32).
    e = e.reshape(TB, S, H) + hid_ref[...][:, None, :]                  # [TB, S, H]
    e = jnp.tanh(e)

    # logits = energy . v  ->  VPU multiply + lane reduce, lane-dense [TB, S].
    logits = jnp.sum(e * v_ref[...][None, :, :], axis=-1)               # [TB, S]

    # Softmax over S (lane axis); EUP approx reciprocal for the denominator.
    m = jnp.max(logits, axis=-1, keepdims=True)
    p = jnp.exp(logits - m)
    denom = jnp.sum(p, axis=-1, keepdims=True)
    o_ref[...] = (p * pl.reciprocal(denom, approx=True)).astype(o_ref.dtype)


def _pick_batch_block(B, S, E2, H, compute_bytes, vmem_budget=8 << 20):
    """Largest divisor of B whose double-buffered block fits the VMEM budget."""
    per_b = 2 * (S * E2 * compute_bytes + S * 4 + H * 4)   # in + out + hidden, x2 bufs
    cap = max(1, vmem_budget // max(per_b, 1))
    if B <= cap:
        return B
    best = 1
    for tb in range(int(min(B, cap)), 0, -1):
        if B % tb == 0:
            best = tb
            break
    return best
    # TODO(synk): for very large S*E2 a second grid axis over S (with masked
    # softmax accumulation) would be needed; not required at these model sizes.


@functools.partial(jax.jit, static_argnames=("compute_dtype",))
def attention_forward(hidden, encoder_outputs, attn_w, attn_b, v_w,
                      compute_dtype=jnp.bfloat16):
    """
    hidden:          [B, H_dec]
    encoder_outputs: [B, S, 2*H_enc]
    attn_w:          [H_dec, 2*H_enc + H_dec]   (nn.Linear weight; cat order = [hidden; enc])
    attn_b:          [H_dec]
    v_w:             [1, H_dec]                 (nn.Linear weight, no bias)
    returns:         [B, S]  softmax attention weights (f32)
    """
    B, S, E2 = encoder_outputs.shape
    H = hidden.shape[1]
    cbytes = jnp.dtype(compute_dtype).itemsize

    # Split attn_fc: pre_energy = [hidden ; encoder_outputs] along features, so
    # the first H columns of attn_w act on hidden, the remaining E2 on enc.
    w_h = attn_w[:, :H]                                     # [H, H]
    w_e = attn_w[:, H:]                                     # [H, E2]

    # Tiny per-batch hidden projection + bias, done once in XLA (f32).
    hidden_term = (hidden.astype(jnp.float32) @ w_h.T.astype(jnp.float32)
                   + attn_b.astype(jnp.float32))            # [B, H]

    we_t = w_e.T.astype(compute_dtype)                      # [E2, H] pre-transposed
    enc = encoder_outputs.astype(compute_dtype)             # MXU input dtype
    v2 = v_w.reshape(1, H).astype(jnp.float32)

    TB = _pick_batch_block(B, S, E2, H, cbytes)
    grid = (B // TB,)

    out = pl.pallas_call(
        _attention_kernel,
        out_shape=jax.ShapeDtypeStruct((B, S), jnp.float32),
        grid_spec=pltpu.PrefetchScalarGridSpec(
            num_scalar_prefetch=0,
            grid=grid,
            in_specs=[
                pl.BlockSpec((TB, S, E2), lambda b: (b, 0, 0)),   # encoder outputs
                pl.BlockSpec((TB, H), lambda b: (b, 0)),          # hidden@W_h^T + b
                pl.BlockSpec((E2, H), lambda b: (0, 0)),          # W_e^T (resident)
                pl.BlockSpec((1, H), lambda b: (0, 0)),           # v
            ],
            out_specs=pl.BlockSpec((TB, S), lambda b: (b, 0)),
        ),
        compiler_params=pltpu.CompilerParams(
            dimension_semantics=("parallel",)),
    )(enc, hidden_term, we_t, v2)
    return out


if __name__ == "__main__":
    # small shapes consistent with the module
    B = 2          # batch
    S = 8          # src_length
    ENC_H = 16     # encoder_hidden_dim  -> encoder_outputs feature = 2*ENC_H
    DEC_H = 32     # decoder_hidden_dim
    D = 2 * ENC_H + DEC_H

    key = jax.random.PRNGKey(0)
    k1, k2, k3, k4, k5 = jax.random.split(key, 5)

    hidden = jax.random.normal(k1, (B, DEC_H), dtype=jnp.float32)
    encoder_outputs = jax.random.normal(k2, (B, S, 2 * ENC_H), dtype=jnp.float32)

    # deterministic parameter init (shapes match nn.Linear in __init__)
    attn_w = jax.random.normal(k3, (DEC_H, D), dtype=jnp.float32) * 0.1
    attn_b = jax.random.normal(k4, (DEC_H,), dtype=jnp.float32) * 0.1
    v_w = jax.random.normal(k5, (1, DEC_H), dtype=jnp.float32) * 0.1

    # pure-JAX reference matching the PyTorch module exactly (concat form, f32)
    hidden_rep = jnp.broadcast_to(hidden[:, None, :], (B, S, DEC_H))
    pre_energy = jnp.concatenate([hidden_rep, encoder_outputs], axis=2)
    energy = jnp.tanh(jnp.einsum("bsd,hd->bsh", pre_energy, attn_w) + attn_b)
    logits = jnp.einsum("bsh,h->bs", energy, v_w[0])
    ref = jax.nn.softmax(logits, axis=1)

    out_f32 = attention_forward(hidden, encoder_outputs, attn_w, attn_b, v_w,
                                compute_dtype=jnp.float32)
    out_bf16 = attention_forward(hidden, encoder_outputs, attn_w, attn_b, v_w,
                                 compute_dtype=jnp.bfloat16)
    jax.block_until_ready((out_f32, out_bf16))

    assert out_f32.shape == (B, S) and out_bf16.shape == (B, S)
    # f32 path: tight (approx-reciprocal tolerance); bf16 MXU-input path: looser
    assert jnp.allclose(out_f32, ref, atol=1e-3, rtol=1e-3)
    assert jnp.allclose(out_bf16, ref, atol=2e-2, rtol=2e-2)
    print("KERNEL_OK")
</pallas_src>

<mosaic_0001>
module attributes {stable_mosaic.version = 11 : i64} {
  func.func @_attention_kernel(%arg0: i32, %arg1: memref<2x8x32xf32, #tpu.memory_space<vmem>>, %arg2: memref<2x32xf32, #tpu.memory_space<vmem>>, %arg3: memref<32x32xf32, #tpu.memory_space<vmem>>, %arg4: memref<1x32xf32, #tpu.memory_space<vmem>>, %arg5: memref<2x8xf32, #tpu.memory_space<vmem>>) attributes {dimension_semantics = [#tpu.dimension_semantics<parallel>], iteration_bounds = array<i64: 1>, scalar_prefetch = 0 : i64, scratch_operands = 0 : i64, tpu.core_type = #tpu.core_type<tc>, window_params = [{transform_indices = @transform_0, window_bounds = array<i64: 2, 8, 32>}, {transform_indices = @transform_1, window_bounds = array<i64: 2, 32>}, {pipeline_mode = #tpu.pipeline_mode<synchronous>, transform_indices = @transform_2, window_bounds = array<i64: 32, 32>}, {pipeline_mode = #tpu.pipeline_mode<synchronous>, transform_indices = @transform_3, window_bounds = array<i64: 1, 32>}, {transform_indices = @transform_4, window_bounds = array<i64: 2, 8>}]} {
    %c0 = arith.constant 0 : index
    %c0_0 = arith.constant 0 : index
    %c0_1 = arith.constant 0 : index
    %0 = vector.load %arg1[%c0, %c0_0, %c0_1] : memref<2x8x32xf32, #tpu.memory_space<vmem>>, vector<2x8x32xf32>
    %1 = vector.shape_cast %0 : vector<2x8x32xf32> to vector<16x32xf32>
    %c0_2 = arith.constant 0 : index
    %c0_3 = arith.constant 0 : index
    %2 = vector.load %arg3[%c0_2, %c0_3] : memref<32x32xf32, #tpu.memory_space<vmem>>, vector<32x32xf32>
    %cst = arith.constant dense<0.000000e+00> : vector<16x32xf32>
    %3 = tpu.matmul %1, %2, %cst {dimension_numbers = #tpu.dot_dimension_numbers<[1], [0], [0], [1], [0, 0, 1, 1], [], []>} : vector<16x32xf32>, vector<32x32xf32>, vector<16x32xf32> -> vector<16x32xf32>
    %4 = vector.shape_cast %3 : vector<16x32xf32> to vector<2x8x32xf32>
    %c0_4 = arith.constant 0 : index
    %c0_5 = arith.constant 0 : index
    %5 = vector.load %arg2[%c0_4, %c0_5] : memref<2x32xf32, #tpu.memory_space<vmem>>, vector<2x32xf32>
    %6 = vector.shape_cast %5 : vector<2x32xf32> to vector<2x1x32xf32>
    %7 = vector.broadcast %6 : vector<2x1x32xf32> to vector<2x8x32xf32>
    %8 = arith.addf %4, %7 : vector<2x8x32xf32>
    %9 = math.tanh %8 : vector<2x8x32xf32>
    %c0_6 = arith.constant 0 : index
    %c0_7 = arith.constant 0 : index
    %10 = vector.load %arg4[%c0_6, %c0_7] : memref<1x32xf32, #tpu.memory_space<vmem>>, vector<1x32xf32>
    %11 = vector.shape_cast %10 : vector<1x32xf32> to vector<1x1x32xf32>
    %12 = vector.broadcast %11 : vector<1x1x32xf32> to vector<2x8x32xf32>
    %13 = arith.mulf %9, %12 : vector<2x8x32xf32>
    %cst_8 = arith.constant dense<0.000000e+00> : vector<2x8xf32>
    %14 = vector.multi_reduction <add>, %13, %cst_8 [2] : vector<2x8x32xf32> to vector<2x8xf32>
    %cst_9 = arith.constant dense<0xFF800000> : vector<2xf32>
    %15 = vector.multi_reduction <maximumf>, %14, %cst_9 [1] : vector<2x8xf32> to vector<2xf32>
    %16 = vector.shape_cast %15 : vector<2xf32> to vector<2x1xf32>
    %17 = vector.broadcast %16 : vector<2x1xf32> to vector<2x8xf32>
    %18 = arith.subf %14, %17 : vector<2x8xf32>
    %19 = math.exp %18 : vector<2x8xf32>
    %cst_10 = arith.constant dense<0.000000e+00> : vector<2xf32>
    %20 = vector.multi_reduction <add>, %19, %cst_10 [1] : vector<2x8xf32> to vector<2xf32>
    %21 = vector.shape_cast %20 : vector<2xf32> to vector<2x1xf32>
    %22 = tpu.reciprocal %21 {approx = true} : vector<2x1xf32> -> vector<2x1xf32>
    %23 = vector.broadcast %22 : vector<2x1xf32> to vector<2x8xf32>
    %24 = arith.mulf %19, %23 : vector<2x8xf32>
    %c0_11 = arith.constant 0 : index
    %c0_12 = arith.constant 0 : index
    %25 = vector.load %arg5[%c0_11, %c0_12] : memref<2x8xf32, #tpu.memory_space<vmem>>, vector<2x8xf32>
    tpu.vector_store %arg5[%c0_11, %c0_12], %24 {strides = array<i32>} : memref<2x8xf32, #tpu.memory_space<vmem>>, vector<2x8xf32>,
    return
  }
  func.func @transform_0(%arg0: i32) -> (i32, i32, i32) {
    %c0_i32 = arith.constant 0 : i32
    %c0_i32_0 = arith.constant 0 : i32
    %c0_i32_1 = arith.constant 0 : i32
    return %arg0, %c0_i32, %c0_i32_0 : i32, i32, i32
  }
  func.func @transform_1(%arg0: i32) -> (i32, i32) {
    %c0_i32 = arith.constant 0 : i32
    %c0_i32_0 = arith.constant 0 : i32
    return %arg0, %c0_i32 : i32, i32
  }
  func.func @transform_2(%arg0: i32) -> (i32, i32) {
    %c0_i32 = arith.constant 0 : i32
    %c0_i32_0 = arith.constant 0 : i32
    %c0_i32_1 = arith.constant 0 : i32
    return %c0_i32, %c0_i32_0 : i32, i32
  }
  func.func @transform_3(%arg0: i32) -> (i32, i32) {
    %c0_i32 = arith.constant 0 : i32
    %c0_i32_0 = arith.constant 0 : i32
    %c0_i32_1 = arith.constant 0 : i32
    return %c0_i32, %c0_i32_0 : i32, i32
  }
  func.func @transform_4(%arg0: i32) -> (i32, i32) {
    %c0_i32 = arith.constant 0 : i32
    %c0_i32_0 = arith.constant 0 : i32
    return %arg0, %c0_i32 : i32, i32
  }
}

</mosaic_0001>

<llo_original>
// kernel: attention_forward.1
$region0: #{attention_forward.1}
  #allocation0 [shape = 'u32[]', space=smem, size = 0x4, offset = 0x4, fixed_abs, tag = 'smem constant byte address 0x4 - core index']
  #allocation1 [shape = 'u32[144,128]{1,0:T(1,128)}', space=vmem, size = 0x12000, scoped, tag = 'internal scratch']
  %s0 = inlined_call_operand.vmem [shape: f32[2,8,32], index: 0, kind: input, shape index: {}]
  %s1 = inlined_call_operand.vmem [shape: f32[2,32], index: 1, kind: input, shape index: {}]
  %s2 = inlined_call_operand.vmem [shape: f32[32,32], index: 2, kind: input, shape index: {}]
  %s3 = inlined_call_operand.vmem [shape: f32[1,32], index: 3, kind: input, shape index: {}]
  %s4 = inlined_call_operand.hbm [shape: f32[2,8], index: 4, kind: output, shape index: {}]
  %s5 = sld [smem:[#allocation0]]
  $region26: #{attention_forward.1} parent=0
    _
  %s7 = ssub.s32 1, %s5
  %s8 = scalar_select 0, %s7, %s5
  $region1: #{attention_forward.1} parent=0
    #allocation2 [shape = 'u8[1024]{0}', space=vmem, size = 0x400, scoped, tag = 'output window, operand 0, single buffered']
    #allocation3 [shape = 's32[1]{0}', space=sflag, size = 0x4, scoped, tag = 'scoped memory for attention_forward.1']
    %9 = vsyncpa [#allocation3], 0
    // Predicated region
    $region2: #{attention_forward.1} parent=1 // pred_check
      _
    $region3: #{attention_forward.1} parent=1 // pred_check_branch
      %11 = sbr.rel (0) target = $region5
    $region4: #{attention_forward.1} parent=1 // pred_region
      _
    $region5: #{attention_forward.1} parent=1 // pred_fallthru
      _
    // Predicated region
    $region6: #{attention_forward.1} parent=1 // pred_check
      _
    $region7: #{attention_forward.1} parent=1 // pred_check_branch
      %13 = sbr.rel (0) target = $region9
    $region8: #{attention_forward.1} parent=1 // pred_region
      _
    $region9: #{attention_forward.1} parent=1 // pred_fallthru
      _
    // Predicated region
    $region10: #{attention_forward.1} parent=1 // pred_check
      _
    $region11: #{attention_forward.1} parent=1 // pred_check_branch
      %15 = sbr.rel (0) target = $region13
    $region12: #{attention_forward.1} parent=1 // pred_region
      _
    $region13: #{attention_forward.1} parent=1 // pred_fallthru
      _
    // Predicated region
    $region14: #{attention_forward.1} parent=1 // pred_check
      _
    $region15: #{attention_forward.1} parent=1 // pred_check_branch
      %17 = sbr.rel (0) target = $region17
    $region16: #{attention_forward.1} parent=1 // pred_region
      _
    $region17: #{attention_forward.1} parent=1 // pred_fallthru
      _
    %v18 = vld [vmem:[%s0] sm:$0xff]
    %v19 = vld [vmem:[%s0 + $0x8] sm:$0xff]
    %v20 = vld [vmem:[%s2] sm:$0xff]
    %v21 = vld [vmem:[%s2 + $0x8] sm:$0xff]
    %v22 = vld [vmem:[%s2 + $0x10] sm:$0xff]
    %v23 = vld [vmem:[%s2 + $0x18] sm:$0xff]
    %vm24 = vcmask 261120
    %v26 = vsel %vm24, %v18, 0
    %v29 = vsel %vm24, %v19, 0
    %31 = vmatprep.subr.mxu0 0.0
    %32 = vmatpush1.msra.mxu0 0.0
    %33 = vmatprep.subr.mxu0 0.0
    %34 = vmatpush1.msra.mxu0 0.0
    %35 = vmatprep.subr.mxu0 0.0
    %36 = vmatpush1.msra.mxu0 0.0
    %37 = vmatprep.subr.mxu0 0.0
    %38 = vmatpush1.msra.mxu0 0.0
    %39 = vmatprep.subr.mxu0 0.0
    %40 = vmatpush1.msra.mxu0 0.0
    %41 = vmatprep.subr.mxu0 0.0
    %42 = vmatpush1.msra.mxu0 0.0
    %43 = vmatprep.subr.mxu0 0.0
    %44 = vmatpush1.msra.mxu0 0.0
    %45 = vmatprep.subr.mxu0 0.0
    %46 = vmatpush1.msra.mxu0 0.0
    %47 = vmatprep.subr.mxu0 0.0
    %48 = vmatpush1.msra.mxu0 0.0
    %49 = vmatprep.subr.mxu0 0.0
    %50 = vmatpush1.msra.mxu0 0.0
    %51 = vmatprep.subr.mxu0 0.0
    %52 = vmatpush1.msra.mxu0 0.0
    %53 = vmatprep.subr.mxu0 0.0
    %54 = vmatpush1.msra.mxu0 0.0
    %55 = vmatprep.subr.mxu0 0.0
    %56 = vmatpush1.msra.mxu0 %v23
    %57 = vmatprep.subr.mxu0 0.0
    %58 = vmatpush1.msra.mxu0 %v22
    %59 = vmatprep.subr.mxu0 0.0
    %60 = vmatpush1.msra.mxu0 %v21
    %61 = vmatprep.subr.mxu0 0.0
    %62 = vmatpush1.msra.mxu0 %v20
    %63 = vmatprep.subr.mxu0 0.0
    %64 = vmatpush2.msra.mxu0 0.0
    %65 = vmatprep.subr.mxu0 0.0
    %66 = vmatpush2.msra.mxu0 0.0
    %67 = vmatprep.subr.mxu0 0.0
    %68 = vmatpush2.msra.mxu0 0.0
    %69 = vmatprep.subr.mxu0 0.0
    %70 = vmatpush2.msra.mxu0 0.0
    %71 = vmatprep.subr.mxu0 0.0
    %72 = vmatpush2.msra.mxu0 0.0
    %73 = vmatprep.subr.mxu0 0.0
    %74 = vmatpush2.msra.mxu0 0.0
    %75 = vmatprep.subr.mxu0 0.0
    %76 = vmatpush2.msra.mxu0 0.0
    %77 = vmatprep.subr.mxu0 0.0
    %78 = vmatpush2.msra.mxu0 0.0
    %79 = vmatprep.subr.mxu0 0.0
    %80 = vmatpush2.msra.mxu0 0.0
    %81 = vmatprep.subr.mxu0 0.0
    %82 = vmatpush2.msra.mxu0 0.0
    %83 = vmatprep.subr.mxu0 0.0
    %84 = vmatpush2.msra.mxu0 0.0
    %85 = vmatprep.subr.mxu0 0.0
    %86 = vmatpush2.msra.mxu0 0.0
    %87 = vmatprep.subr.mxu0 0.0
    %88 = vmatpush2.msra.mxu0 0.0
    %89 = vmatprep.subr.mxu0 0.0
    %90 = vmatpush2.msra.mxu0 0.0
    %91 = vmatprep.subr.mxu0 0.0
    %92 = vmatpush2.msra.mxu0 0.0
    %93 = vmatprep.subr.mxu0 0.0
    %94 = vmatpush2.msra.mxu0 0.0
    %95 = vmatprep.mubr.f32.mxu0 0.0
    %96 = vmatmul.mubr.f32.gmra.mxu0 %v26
    %v97 = vpop.f32.mrf.mxu0
    %v98 = vadd.f32 0.0, %v97
    %v99 = vpop.f32.mrf.mxu0
    %100 = vmatprep.mubr.f32.mxu0 0.0
    %101 = vmatmul.mubr.f32.gmra.mxu0 %v29
    %v102 = vpop.f32.mrf.mxu0
    %v103 = vadd.f32 0.0, %v102
    %v104 = vpop.f32.mrf.mxu0
    %105 = vdwg.mxu0
    %v106 = vld [vmem:[%s1] sm:$0x3]
    %v109 = vunpack.c.l.s4 1966171168
    %v110 = vunpack.c.0.s8 %v109
    %v111 = vlaneseq
    %v112 = vshrl.u32 %v111, 7
    %v113 = vsub.s32 %v110, %v112
    %v114 = vrot.slane %v106, %v113
    %v115 = vcombine.high %v114, %v114
    %v117 = vunpack.c.l.s4 1966171168
    %v118 = vunpack.c.0.s8 %v117
    %v119 = vlaneseq
    %v120 = vshrl.u32 %v119, 7
    %v121 = vsub.s32 %v118, %v120
    %v122 = vrot.slane %v114, %v121
    %v124 = vunpack.c.l.s4 1966171168
    %v125 = vunpack.c.0.s8 %v124
    %v126 = vlaneseq
    %v127 = vshrl.u32 %v126, 7
    %v128 = vsub.s32 %v125, %v127
    %v129 = vrot.slane %v115, %v128
    %v130 = vlaneseq
    %v131 = vshrl.u32 %v130, 7
    %v132 = vsub.s32 0, %v131
    %v133 = vrot.slane %v122, %v132
    %v134 = vlaneseq
    %v135 = vshrl.u32 %v134, 7
    %v136 = vsub.s32 0, %v135
    %v137 = vrot.slane %v129, %v136
    %v140 = vadd.f32 %v98, %v133
    %v141 = vadd.f32 %v103, %v137
    %v142 = vtanh.pop %v140
    %v143 = vtanh.pop %v141
    %v144 = vld [vmem:[%s3] sm:$0x1]
    %v146 = vlaneseq
    %v147 = vshrl.u32 %v146, 7
    %v148 = vsub.s32 0, %v147
    %v149 = vrot.slane %v144, %v148
    %v151 = vmul.f32 %v142, %v149
    %v152 = vmul.f32 %v143, %v149
    %v153 = vsel %vm24, %v151, 0.0
    %154 = vadd.xlane.f32.xlu0 %v153
    %v155 = vpop.xlane.xlu0 %154
    %v156 = vsel %vm24, %v152, 0.0
    %157 = vadd.xlane.f32.xlu0 %v156
    %v158 = vpop.xlane.xlu0 %157
    %v161 = vlaneseq
    %v162 = vand.u32 %v161, 127
    %v163 = vlaneseq
    %v164 = vshrl.u32 %v163, 7
    %v165 = vsub.s32 %v162, %v164
    %v166 = vrot.slane %v155, %v165
    %v167 = vlaneseq
    %v168 = vshrl.u32 %v167, 7
    %v169 = vsub.s32 %v162, %v168
    %v170 = vrot.slane %v158, %v169
    %vm171 = vcmask 1041409
    %v172 = vsel %vm171, %v170, %v166
    %vm174 = vcmask 58368
    %v175 = vsel %vm174, %v172, -inf
    %176 = vmax.xlane.f32.xlu0 %v175
    %v177 = vpop.xlane.xlu0 %176
    %v179 = vlaneseq
    %v180 = vshrl.u32 %v179, 7
    %v181 = vsub.s32 0, %v180
    %v182 = vrot.slane %v177, %v181
    %v183 = vlaneseq
    %v184 = vshrl.u32 %v183, 7
    %v185 = vsub.s32 1, %v184
    %v186 = vrot.slane %v177, %v185
    %v189 = vsub.f32 %v155, %v182
    %v190 = vsub.f32 %v158, %v186
    %v191 = vmul.f32 %v189, 1.442695
    %v192 = vpow.pop %v191
    %v193 = vmul.f32 %v190, 1.442695
    %v194 = vpow.pop %v193
    %197 = vset.pattern.permute.xlu0 0
    %198 = vperm.xlu0 %197, %v192
    %v199 = vpop.permute.xlu0 %198
    %200 = vset.pattern.permute.xlu0 0
    %201 = vperm.xlu0 %200, %v194
    %v202 = vpop.permute.xlu0 %201
    %v203 = vlaneseq
    %v204 = vshrl.u32 %v203, 7
    %v205 = vsub.s32 %v162, %v204
    %v206 = vrot.slane %v199, %v205
    %v207 = vlaneseq
    %v208 = vshrl.u32 %v207, 7
    %v209 = vsub.s32 %v162, %v208
    %v210 = vrot.slane %v202, %v209
    %v211 = vsel %vm171, %v210, %v206
    %v213 = vsel %vm174, %v211, 0.0
    %214 = vadd.xlane.f32.xlu0 %v213
    %v215 = vpop.xlane.xlu0 %214
    %v216 = vrcp.pop %v215
    %v218 = vlaneseq
    %v219 = vshrl.u32 %v218, 7
    %v220 = vsub.s32 0, %v219
    %v221 = vrot.slane %v216, %v220
    %v222 = vlaneseq
    %v223 = vshrl.u32 %v222, 7
    %v224 = vsub.s32 1, %v223
    %v225 = vrot.slane %v216, %v224
    %v228 = vmul.f32 %v192, %v221
    %v229 = vmul.f32 %v194, %v225
    %232 = vset.pattern.permute.xlu0 0
    %233 = vperm.xlu0 %232, %v228
    %v234 = vpop.permute.xlu0 %233
    %235 = vset.pattern.permute.xlu0 0
    %236 = vperm.xlu0 %235, %v229
    %v237 = vpop.permute.xlu0 %236
    %v238 = vlaneseq
    %v239 = vshrl.u32 %v238, 7
    %v240 = vsub.s32 %v162, %v239
    %v241 = vrot.slane %v234, %v240
    %v242 = vlaneseq
    %v243 = vshrl.u32 %v242, 7
    %v244 = vsub.s32 %v162, %v243
    %v245 = vrot.slane %v237, %v244
    %v246 = vsel %vm171, %v245, %v241
    %248 = vst.msk [vmem:[#allocation2] sm:$0x3] %vm174, %v246
    // Predicated region
    $region18: #{attention_forward.1} parent=1 // pred_check
      _
    $region19: #{attention_forward.1} parent=1 // pred_check_branch
      %250 = sbr.rel (0) target = $region21
    $region20: #{attention_forward.1} parent=1 // pred_region
      %s252 = ssub.s32 32, 32
      %253 = vsyncadd [#allocation3], %s252
      %s255 = sshll.u32 [#allocation2], 4
      %s256 = int_to_ptr.vmem [resolvable:$true] %s255
      %258 = dma.vmem_to_hbm [thread:$0]  %s256, 32, %s4, [#allocation3]
    $region21: #{attention_forward.1} parent=1 // pred_fallthru
      _
    // Predicated region
    $region22: #{attention_forward.1} parent=1 // pred_check
      _
    $region23: #{attention_forward.1} parent=1 // pred_check_branch
      %260 = sbr.rel (0) target = $region25
    $region24: #{attention_forward.1} parent=1 // pred_region
      %261 = dma.done [#allocation3], 32
    $region25: #{attention_forward.1} parent=1 // pred_fallthru
      _
    %262 = vsyncpa [#allocation3], 1

</llo_original>
